<compile_context>
chip_gen: v7x
topology: tpu7x:2x2x1
jax: 0.10.0
libtpu: 0.0.40
codegen_flags: <defaults>
</compile_context>

<pallas_src>
import functools

import jax
import jax.numpy as jnp
import numpy as np
from jax.experimental import pallas as pl
from jax.experimental.pallas import tpu as pltpu

MARGIN = 0.5
EPS = 1e-7
_LANE = 128


def _round_up(x, k):
    return (x + k - 1) // k * k


def _triplet_kernel(idx_a_ref, idx_b_ref, img1_ref, img2_ref, agg_ref,
                    out_ref, stk_ref, acc_ref, *,
                    n, hw_p, margin, eps, inv_denom):
    bi = pl.program_id(0)

    @pl.when(bi == 0)
    def _():
        acc_ref[...] = jnp.zeros_like(acc_ref)

    # Stack the two [C, HW] images along the lane (HW) axis -> [C, 2*HW].
    stk_ref[:, 0:hw_p] = img1_ref[...]
    stk_ref[:, hw_p:2 * hw_p] = img2_ref[...]
    stacked = stk_ref[...]

    npad = idx_a_ref.shape[1]

    # Signed one-hot: +1 at the image-1 index, -1 at (HW + image-2 index).
    # Out-of-range (sentinel) indices give an all-zero column -> zero diff.
    row = jax.lax.broadcasted_iota(jnp.int32, (2 * hw_p, npad), 0)
    onehot = ((row == idx_a_ref[...]).astype(jnp.float32)
              - (row == idx_b_ref[...]).astype(jnp.float32))

    # One MXU matmul produces every pair's difference vector: [C, NPAD].
    diff = jnp.dot(stacked, onehot, preferred_element_type=jnp.float32)

    # Per-pair L2 distance: sublane reduce over C, then EUP sqrt.  [1, NPAD]
    sq = jnp.sum(diff * diff, axis=0, keepdims=True)
    dist = jnp.sqrt(sq + eps)

    # pos_dist[i] - mean_k neg_dist[k, i] via a static aggregation matmul.
    dist8 = jnp.broadcast_to(dist, (8, npad))
    s = jnp.dot(dist8, agg_ref[...], preferred_element_type=jnp.float32)[0:1, :]

    lane = jax.lax.broadcasted_iota(jnp.int32, s.shape, 1)
    valid = (lane < n).astype(jnp.float32)
    acc_ref[...] += jnp.maximum(s + margin, 0.0) * valid

    # Mean over (batch, n).  Only the final writeback is observed.
    out_ref[...] = jnp.sum(acc_ref[...], axis=1, keepdims=True) * inv_denom


def triplet_loss(out_1, out_2, xy_1, xy_2, nonmatch_2, margin=MARGIN, eps=EPS):
    """Mirrors TripletLoss.forward.

    out_1, out_2 : [B, C, W, H] float descriptor images
    xy_1, xy_2   : [B, N, 2] int (w, h) coords of matching points
    nonmatch_2   : [B, M, N, 2] int coords of M negatives per positive
    Returns the scalar loss (float32).
    """
    b, c, w, h = out_1.shape
    hw = w * h
    n = xy_1.shape[1]
    m = nonmatch_2.shape[1]
    npairs = n + m * n

    hw_p = _round_up(hw, _LANE)
    npad = _round_up(npairs, _LANE)
    npos_pad = _round_up(n, _LANE)

    # Images stay [C, HW]: reshape only, no transpose.  Pad HW to a lane multiple.
    img1 = out_1.reshape(b, c, hw).astype(jnp.float32)
    img2 = out_2.reshape(b, c, hw).astype(jnp.float32)
    if hw_p != hw:
        pad = ((0, 0), (0, 0), (0, hw_p - hw))
        img1 = jnp.pad(img1, pad)
        img2 = jnp.pad(img2, pad)

    def flat(pos):  # (b, k, 2) -> (b, k) flat index = w_coord * h + h_coord
        pos = pos.astype(jnp.int32)
        return pos[..., 0] * h + pos[..., 1]

    i1 = flat(xy_1)                                # (b, n)   indices into image 1
    i2 = flat(xy_2)                                # (b, n)   indices into image 2
    inm = flat(nonmatch_2.reshape(b, m * n, 2))    # (b, m*n) indices into image 2

    # Pair columns: [n positives | m*n negatives (k-major: column n + k*n + i)].
    idx_a = jnp.concatenate([i1, jnp.tile(i1, (1, m))], axis=1)   # image-1 side
    idx_b = jnp.concatenate([i2, inm], axis=1) + hw_p             # image-2 side
    sentinel = 2 * hw_p                                            # -> zero one-hot column
    pad_cols = npad - npairs
    idx_a = jnp.pad(idx_a, ((0, 0), (0, pad_cols)), constant_values=sentinel)
    idx_b = jnp.pad(idx_b, ((0, 0), (0, pad_cols)), constant_values=sentinel)
    idx_a = idx_a.reshape(b, 1, npad)
    idx_b = idx_b.reshape(b, 1, npad)

    # Static aggregation matrix: column i collects +pos_dist[i] - (1/m) * sum_k neg_dist[k, i].
    agg_np = np.zeros((npad, npos_pad), np.float32)
    agg_np[np.arange(n), np.arange(n)] = 1.0
    for k in range(m):
        agg_np[n + k * n + np.arange(n), np.arange(n)] = -1.0 / m
    agg = jnp.asarray(agg_np)

    inv_denom = 1.0 / float(b * n)
    kernel = functools.partial(_triplet_kernel, n=n, hw_p=hw_p,
                               margin=float(margin), eps=float(eps),
                               inv_denom=inv_denom)

    cost = pl.CostEstimate(
        flops=b * (2 * c * (2 * hw_p) * npad + 2 * 8 * npad * npos_pad),
        transcendentals=b * npad,
        bytes_accessed=(b * (2 * c * hw_p + 2 * npad) + npad * npos_pad + 1) * 4,
    )

    loss = pl.pallas_call(
        kernel,
        out_shape=jax.ShapeDtypeStruct((1, 1), jnp.float32),
        grid_spec=pltpu.PrefetchScalarGridSpec(
            num_scalar_prefetch=0,
            grid=(b,),
            in_specs=[
                pl.BlockSpec((None, 1, npad), lambda i: (i, 0, 0)),   # idx_a (lane-dense)
                pl.BlockSpec((None, 1, npad), lambda i: (i, 0, 0)),   # idx_b (lane-dense)
                pl.BlockSpec((None, c, hw_p), lambda i: (i, 0, 0)),   # image 1 [C, HW]
                pl.BlockSpec((None, c, hw_p), lambda i: (i, 0, 0)),   # image 2 [C, HW]
                pl.BlockSpec((npad, npos_pad), lambda i: (0, 0)),     # agg (resident)
            ],
            out_specs=pl.BlockSpec((1, 1), lambda i: (0, 0)),
            scratch_shapes=[
                pltpu.VMEM((c, 2 * hw_p), jnp.float32),   # stacked [img1 | img2]
                pltpu.VMEM((1, npos_pad), jnp.float32),   # hinge accumulator
            ],
        ),
        compiler_params=pltpu.CompilerParams(
            dimension_semantics=("arbitrary",)),
        cost_estimate=cost,
    )(idx_a, idx_b, img1, img2, agg)

    return loss[0, 0]


def _reference(out_1, out_2, xy_1, xy_2, nonmatch_2, margin=MARGIN, eps=EPS):
    """Pure-JAX mirror of the PyTorch TripletLoss.forward (for verification)."""
    b, c, w, h = out_1.shape

    def feats(img, pos):
        flat = img.reshape(b, c, w * h)
        idx = pos[..., 0].astype(jnp.int32) * h + pos[..., 1].astype(jnp.int32)
        return jnp.take_along_axis(flat, idx[:, None, :], axis=2).transpose(0, 2, 1)

    f1 = feats(out_1, xy_1)                                    # (b, n, c)
    f2 = feats(out_2, xy_2)                                    # (b, n, c)
    pos_d = jnp.sqrt(jnp.sum((f1 - f2) ** 2, axis=-1) + eps)   # (b, n)

    _, m, n, _ = nonmatch_2.shape
    fnm = feats(out_2, nonmatch_2.reshape(b, m * n, 2))        # (b, m*n, c)
    f1r = jnp.tile(f1, (1, m, 1))                              # == repeat(1, m, 1)
    neg_d = jnp.sqrt(jnp.sum((f1r - fnm) ** 2, axis=-1) + eps)
    neg_d = neg_d.reshape(b, m, n).mean(axis=1)                # (b, n)
    return jnp.mean(jax.nn.relu(pos_d - neg_d + margin))


if __name__ == "__main__":
    key = jax.random.PRNGKey(0)
    k1, k2, k3, k4, k5 = jax.random.split(key, 5)

    B, C, W, H = 2, 8, 16, 16     # batch, descriptor dim, spatial
    N_MATCH = 8                   # positive pairs per image
    M_NONMATCH = 4                # negatives per positive

    out_1 = jax.random.normal(k1, (B, C, W, H), dtype=jnp.float32)
    out_2 = jax.random.normal(k2, (B, C, W, H), dtype=jnp.float32)

    def rand_coords(k, shape):
        kw, kh = jax.random.split(k)
        vw = jax.random.randint(kw, shape + (1,), 0, W, dtype=jnp.int32)
        vh = jax.random.randint(kh, shape + (1,), 0, H, dtype=jnp.int32)
        return jnp.concatenate([vw, vh], axis=-1)

    xy_1 = rand_coords(k3, (B, N_MATCH))              # (B, N, 2)
    xy_2 = rand_coords(k4, (B, N_MATCH))              # (B, N, 2)
    nonmatch_2 = rand_coords(k5, (B, M_NONMATCH, N_MATCH))   # (B, M, N, 2)

    loss = triplet_loss(out_1, out_2, xy_1, xy_2, nonmatch_2)
    jax.block_until_ready(loss)

    ref = _reference(out_1, out_2, xy_1, xy_2, nonmatch_2)
    assert jnp.allclose(loss, ref, rtol=1e-5, atol=1e-5), (loss, ref)

    print("KERNEL_OK")
</pallas_src>

<mosaic_0001>
module attributes {stable_mosaic.version = 11 : i64} {
  func.func @_triplet_kernel(%arg0: i32, %arg1: memref<1x1x128xi32, #tpu.memory_space<vmem>>, %arg2: memref<1x1x128xi32, #tpu.memory_space<vmem>>, %arg3: memref<1x8x256xf32, #tpu.memory_space<vmem>>, %arg4: memref<1x8x256xf32, #tpu.memory_space<vmem>>, %arg5: memref<128x128xf32, #tpu.memory_space<vmem>>, %arg6: memref<1x1xf32, #tpu.memory_space<vmem>>, %arg7: memref<8x512xf32, #tpu.memory_space<vmem>>, %arg8: memref<1x128xf32, #tpu.memory_space<vmem>>) attributes {dimension_semantics = [#tpu.dimension_semantics<arbitrary>], iteration_bounds = array<i64: 2>, scalar_prefetch = 0 : i64, scratch_operands = 2 : i64, tpu.core_type = #tpu.core_type<tc>, window_params = [{transform_indices = @transform_0, window_bounds = array<i64: 1, 1, 128>}, {transform_indices = @transform_1, window_bounds = array<i64: 1, 1, 128>}, {transform_indices = @transform_2, window_bounds = array<i64: 1, 8, 256>}, {transform_indices = @transform_3, window_bounds = array<i64: 1, 8, 256>}, {pipeline_mode = #tpu.pipeline_mode<synchronous>, transform_indices = @transform_4, window_bounds = array<i64: 128, 128>}, {pipeline_mode = #tpu.pipeline_mode<synchronous>, transform_indices = @transform_5, window_bounds = array<i64: 1, 1>}]} {
    %c0_i32 = arith.constant 0 : i32
    %0 = arith.cmpi eq, %arg0, %c0_i32 : i32
    %1 = arith.extui %0 : i1 to i32
    %c0_i32_0 = arith.constant 0 : i32
    %2 = arith.cmpi ne, %1, %c0_i32_0 : i32
    scf.if %2 {
      %cst_34 = arith.constant 0.000000e+00 : f32
      %55 = vector.broadcast %cst_34 : f32 to vector<1x128xf32>
      %c0_35 = arith.constant 0 : index
      %c0_36 = arith.constant 0 : index
      %56 = vector.load %arg8[%c0_35, %c0_36] : memref<1x128xf32, #tpu.memory_space<vmem>>, vector<1x128xf32>
      tpu.vector_store %arg8[%c0_35, %c0_36], %55 {strides = array<i32>} : memref<1x128xf32, #tpu.memory_space<vmem>>, vector<1x128xf32>,
    } else {
    }
    %c0 = arith.constant 0 : index
    %c0_1 = arith.constant 0 : index
    %c0_2 = arith.constant 0 : index
    %3 = vector.load %arg3[%c0, %c0_1, %c0_2] : memref<1x8x256xf32, #tpu.memory_space<vmem>>, vector<1x8x256xf32>
    %4 = vector.shape_cast %3 : vector<1x8x256xf32> to vector<8x256xf32>
    %c0_3 = arith.constant 0 : index
    %c0_4 = arith.constant 0 : index
    %5 = vector.load %arg7[%c0_3, %c0_4] : memref<8x512xf32, #tpu.memory_space<vmem>>, vector<8x256xf32>
    tpu.vector_store %arg7[%c0_3, %c0_4], %4 {strides = array<i32>} : memref<8x512xf32, #tpu.memory_space<vmem>>, vector<8x256xf32>,
    %c0_5 = arith.constant 0 : index
    %c0_6 = arith.constant 0 : index
    %c0_7 = arith.constant 0 : index
    %6 = vector.load %arg4[%c0_5, %c0_6, %c0_7] : memref<1x8x256xf32, #tpu.memory_space<vmem>>, vector<1x8x256xf32>
    %7 = vector.shape_cast %6 : vector<1x8x256xf32> to vector<8x256xf32>
    %c0_8 = arith.constant 0 : index
    %c256 = arith.constant 256 : index
    %8 = vector.load %arg7[%c0_8, %c256] : memref<8x512xf32, #tpu.memory_space<vmem>>, vector<8x256xf32>
    tpu.vector_store %arg7[%c0_8, %c256], %7 {strides = array<i32>} : memref<8x512xf32, #tpu.memory_space<vmem>>, vector<8x256xf32>,
    %c0_9 = arith.constant 0 : index
    %c0_10 = arith.constant 0 : index
    %9 = vector.load %arg7[%c0_9, %c0_10] : memref<8x512xf32, #tpu.memory_space<vmem>>, vector<8x512xf32>
    %10 = tpu.iota {dimensions = array<i32: 0>} : vector<512x128xi32>
    %c0_11 = arith.constant 0 : index
    %c0_12 = arith.constant 0 : index
    %c0_13 = arith.constant 0 : index
    %11 = vector.load %arg1[%c0_11, %c0_12, %c0_13] : memref<1x1x128xi32, #tpu.memory_space<vmem>>, vector<1x1x128xi32>
    %12 = vector.shape_cast %11 : vector<1x1x128xi32> to vector<1x128xi32>
    %13 = vector.broadcast %12 : vector<1x128xi32> to vector<512x128xi32>
    %14 = arith.cmpi eq, %10, %13 : vector<512x128xi32>
    %15 = arith.extui %14 : vector<512x128xi1> to vector<512x128xi32>
    %16 = arith.sitofp %15 : vector<512x128xi32> to vector<512x128xf32>
    %c0_14 = arith.constant 0 : index
    %c0_15 = arith.constant 0 : index
    %c0_16 = arith.constant 0 : index
    %17 = vector.load %arg2[%c0_14, %c0_15, %c0_16] : memref<1x1x128xi32, #tpu.memory_space<vmem>>, vector<1x1x128xi32>
    %18 = vector.shape_cast %17 : vector<1x1x128xi32> to vector<1x128xi32>
    %19 = vector.broadcast %18 : vector<1x128xi32> to vector<512x128xi32>
    %20 = arith.cmpi eq, %10, %19 : vector<512x128xi32>
    %21 = arith.extui %20 : vector<512x128xi1> to vector<512x128xi32>
    %22 = arith.sitofp %21 : vector<512x128xi32> to vector<512x128xf32>
    %23 = arith.subf %16, %22 : vector<512x128xf32>
    %cst = arith.constant dense<0.000000e+00> : vector<8x128xf32>
    %24 = tpu.matmul %9, %23, %cst {dimension_numbers = #tpu.dot_dimension_numbers<[1], [0], [0], [1], [0, 0, 1, 1], [], []>} : vector<8x512xf32>, vector<512x128xf32>, vector<8x128xf32> -> vector<8x128xf32>
    %25 = arith.mulf %24, %24 : vector<8x128xf32>
    %cst_17 = arith.constant dense<0.000000e+00> : vector<128xf32>
    %26 = vector.multi_reduction <add>, %25, %cst_17 [0] : vector<8x128xf32> to vector<128xf32>
    %27 = vector.shape_cast %26 : vector<128xf32> to vector<1x128xf32>
    %cst_18 = arith.constant 1.000000e-07 : f32
    %28 = vector.broadcast %cst_18 : f32 to vector<1x128xf32>
    %29 = arith.addf %27, %28 : vector<1x128xf32>
    %30 = math.sqrt %29 : vector<1x128xf32>
    %31 = vector.shape_cast %30 : vector<1x128xf32> to vector<1x128xf32>
    %32 = vector.broadcast %31 : vector<1x128xf32> to vector<8x128xf32>
    %c0_19 = arith.constant 0 : index
    %c0_20 = arith.constant 0 : index
    %33 = vector.load %arg5[%c0_19, %c0_20] : memref<128x128xf32, #tpu.memory_space<vmem>>, vector<128x128xf32>
    %cst_21 = arith.constant dense<0.000000e+00> : vector<8x128xf32>
    %34 = tpu.matmul %32, %33, %cst_21 {dimension_numbers = #tpu.dot_dimension_numbers<[1], [0], [0], [1], [0, 0, 1, 1], [], []>} : vector<8x128xf32>, vector<128x128xf32>, vector<8x128xf32> -> vector<8x128xf32>
    %35 = vector.extract_strided_slice %34 {offsets = [0, 0], sizes = [1, 128], strides = [1, 1]} : vector<8x128xf32> to vector<1x128xf32>
    %36 = tpu.iota {dimensions = array<i32: 1>} : vector<1x128xi32>
    %c8_i32 = arith.constant 8 : i32
    %37 = vector.broadcast %c8_i32 : i32 to vector<1x128xi32>
    %38 = arith.cmpi slt, %36, %37 : vector<1x128xi32>
    %39 = arith.extui %38 : vector<1x128xi1> to vector<1x128xi32>
    %40 = arith.sitofp %39 : vector<1x128xi32> to vector<1x128xf32>
    %c0_22 = arith.constant 0 : index
    %c0_23 = arith.constant 0 : index
    %41 = vector.load %arg8[%c0_22, %c0_23] : memref<1x128xf32, #tpu.memory_space<vmem>>, vector<1x128xf32>
    %cst_24 = arith.constant 5.000000e-01 : f32
    %42 = vector.broadcast %cst_24 : f32 to vector<1x128xf32>
    %43 = arith.addf %35, %42 : vector<1x128xf32>
    %cst_25 = arith.constant 0.000000e+00 : f32
    %44 = vector.broadcast %cst_25 : f32 to vector<1x128xf32>
    %45 = arith.maximumf %43, %44 : vector<1x128xf32>
    %46 = arith.mulf %45, %40 : vector<1x128xf32>
    %47 = arith.addf %41, %46 : vector<1x128xf32>
    %c0_26 = arith.constant 0 : index
    %c0_27 = arith.constant 0 : index
    %48 = vector.load %arg8[%c0_26, %c0_27] : memref<1x128xf32, #tpu.memory_space<vmem>>, vector<1x128xf32>
    tpu.vector_store %arg8[%c0_26, %c0_27], %47 {strides = array<i32>} : memref<1x128xf32, #tpu.memory_space<vmem>>, vector<1x128xf32>,
    %c0_28 = arith.constant 0 : index
    %c0_29 = arith.constant 0 : index
    %49 = vector.load %arg8[%c0_28, %c0_29] : memref<1x128xf32, #tpu.memory_space<vmem>>, vector<1x128xf32>
    %cst_30 = arith.constant dense<0.000000e+00> : vector<1xf32>
    %50 = vector.multi_reduction <add>, %49, %cst_30 [1] : vector<1x128xf32> to vector<1xf32>
    %51 = vector.shape_cast %50 : vector<1xf32> to vector<1x1xf32>
    %cst_31 = arith.constant 6.250000e-02 : f32
    %52 = vector.broadcast %cst_31 : f32 to vector<1x1xf32>
    %53 = arith.mulf %51, %52 : vector<1x1xf32>
    %c0_32 = arith.constant 0 : index
    %c0_33 = arith.constant 0 : index
    %54 = vector.load %arg6[%c0_32, %c0_33] : memref<1x1xf32, #tpu.memory_space<vmem>>, vector<1x1xf32>
    tpu.vector_store %arg6[%c0_32, %c0_33], %53 {strides = array<i32>} : memref<1x1xf32, #tpu.memory_space<vmem>>, vector<1x1xf32>,
    return
  }
  func.func @transform_0(%arg0: i32) -> (i32, i32, i32) {
    %c0_i32 = arith.constant 0 : i32
    %c0_i32_0 = arith.constant 0 : i32
    %c0_i32_1 = arith.constant 0 : i32
    return %arg0, %c0_i32, %c0_i32_0 : i32, i32, i32
  }
  func.func @transform_1(%arg0: i32) -> (i32, i32, i32) {
    %c0_i32 = arith.constant 0 : i32
    %c0_i32_0 = arith.constant 0 : i32
    %c0_i32_1 = arith.constant 0 : i32
    return %arg0, %c0_i32, %c0_i32_0 : i32, i32, i32
  }
  func.func @transform_2(%arg0: i32) -> (i32, i32, i32) {
    %c0_i32 = arith.constant 0 : i32
    %c0_i32_0 = arith.constant 0 : i32
    %c0_i32_1 = arith.constant 0 : i32
    return %arg0, %c0_i32, %c0_i32_0 : i32, i32, i32
  }
  func.func @transform_3(%arg0: i32) -> (i32, i32, i32) {
    %c0_i32 = arith.constant 0 : i32
    %c0_i32_0 = arith.constant 0 : i32
    %c0_i32_1 = arith.constant 0 : i32
    return %arg0, %c0_i32, %c0_i32_0 : i32, i32, i32
  }
  func.func @transform_4(%arg0: i32) -> (i32, i32) {
    %c0_i32 = arith.constant 0 : i32
    %c0_i32_0 = arith.constant 0 : i32
    %c0_i32_1 = arith.constant 0 : i32
    return %c0_i32, %c0_i32_0 : i32, i32
  }
  func.func @transform_5(%arg0: i32) -> (i32, i32) {
    %c0_i32 = arith.constant 0 : i32
    %c0_i32_0 = arith.constant 0 : i32
    %c0_i32_1 = arith.constant 0 : i32
    return %c0_i32, %c0_i32_0 : i32, i32
  }
}

</mosaic_0001>

<llo_original>
// kernel: tpu_custom_call.1
$region0: #{tpu_custom_call.1}
  #allocation0 [shape = 'u32[]', space=smem, size = 0x4, offset = 0x4, fixed_abs, tag = 'smem constant byte address 0x4 - core index']
  #allocation1 [shape = 'u32[144,128]{1,0:T(1,128)}', space=vmem, size = 0x12000, scoped, tag = 'internal scratch']
  #allocation2 [shape = 'f32[8,512]{1,0:T(8,128)}', space=vmem, size = 0x4000, scoped, tag = 'scratch operand']
  #allocation3 [shape = 'f32[1,128]{1,0:T(1,128)}', space=vmem, size = 0x200, scoped, tag = 'scratch operand']
  %s0 = inlined_call_operand.hbm [shape: s32[2,1,128], index: 0, kind: input, shape index: {}]
  %s1 = inlined_call_operand.vmem [shape: s32[2,1,128], index: 1, kind: input, shape index: {}]
  %s2 = inlined_call_operand.hbm [shape: f32[2,8,256], index: 2, kind: input, shape index: {}]
  %s3 = inlined_call_operand.hbm [shape: f32[2,8,256], index: 3, kind: input, shape index: {}]
  %s4 = inlined_call_operand.hbm [shape: f32[128,128], index: 4, kind: input, shape index: {}]
  %s5 = inlined_call_operand.hbm [shape: f32[1,1], index: 5, kind: output, shape index: {}]
  %s6 = sld [smem:[#allocation0]]
  $region73: #{tpu_custom_call.1} parent=0
    _
  %s8 = ssub.s32 1, %s6
  %s9 = scalar_select 0, %s8, %s6
  $region1: #{tpu_custom_call.1} parent=0
    #allocation4 [shape = 'u8[1024]{0}', space=vmem, size = 0x400, scoped, tag = 'input window, operand 0']
    #allocation5 [shape = 's32[2]{0}', space=sflag, size = 0x8, scoped, tag = 'scoped memory for tpu_custom_call.1']
    #allocation6 [shape = 's32[2]{0}', space=sflag, size = 0x8, scoped, tag = 'scoped memory for tpu_custom_call.1']
    #allocation7 [shape = 'u8[16384]{0}', space=vmem, size = 0x4000, scoped, tag = 'input window, operand 2']
    #allocation8 [shape = 's32[2]{0}', space=sflag, size = 0x8, scoped, tag = 'scoped memory for tpu_custom_call.1']
    #allocation9 [shape = 'u8[16384]{0}', space=vmem, size = 0x4000, scoped, tag = 'input window, operand 3']
    #allocation10 [shape = 'u8[65536]{0}', space=vmem, size = 0x10000, scoped, tag = 'input window, operand 4, single buffered']
    #allocation11 [shape = 's32[1]{0}', space=sflag, size = 0x4, scoped, tag = 'scoped memory for tpu_custom_call.1']
    #allocation12 [shape = 'u8[512]{0}', space=vmem, size = 0x400, scoped, tag = 'output window, operand 0, single buffered']
    %10 = vsyncpa [#allocation5], 0
    %s11 = scalar_lea.sflag [#allocation5], 1
    %12 = vsyncpa %s11, 0
    %13 = vsyncpa [#allocation8], 0
    %s14 = scalar_lea.sflag [#allocation8], 1
    %15 = vsyncpa %s14, 0
    %16 = vsyncpa [#allocation11], 0
    %17 = vsyncpa [#allocation6], 0
    loop: start=0, step=1, limit=4
    $region2: #{tpu_custom_call.1} parent=1 // loop_pre_header
      _
    $region3: #{tpu_custom_call.1} parent=1 // loop_header
      %s19 = sphi 0, %s23
      %p20 = scmp.ge.s32.totalorder %s19, 4
      %s29 = sphi 0, %s31
      %s32 = sphi 0, %s29
      %s33 = sphi 0, %s32
      %s49 = sphi 0, %s33
      %s55 = sphi 0, %s57
      %s58 = sphi 0, %s55
      %s59 = sphi 0, %s58
      %s75 = sphi 0, %s59
      %s81 = sphi 0, %s83
      %s84 = sphi 0, %s81
      %s85 = sphi 0, %s84
      %s101 = sphi 0, %s85
      %s107 = sphi 0, %s109
      %s110 = sphi 0, %s107
      %s111 = sphi 0, %s110
      %s127 = sphi 0, %s111
      %s131 = sphi 0, %s131
      %s133 = sphi 0, %s131
      %s134 = sphi 0, %s133
      %s148 = sphi 0, %s134
      %s152 = sphi 0, %s152
      %s154 = sphi 0, %s152
      %s155 = sphi 0, %s154
      %s169 = sphi 0, %s155
    $region4: #{tpu_custom_call.1} parent=1 // loop_header_branch
      %22 = sbr.rel (%p20) target = $region8
    $region5: #{tpu_custom_call.1} parent=1 // loop_body
      %s24 = ssub.s32 %s19, 1
      %s25 = ssub.s32 %s19, 2
      %s26 = sadd.s32 %s19, 1
      %s27 = ssub.s32 %s19, %s26
      %p28 = scmp.eq.s32.totalorder %s27, 0
      %s30 = sadd.s32 %s29, 1
      %s31 = scalar_select %p28, %s29, %s30
      %p34 = pneg %p28
      %p35 = scmp.eq.s32.totalorder %s19, 1
      %p36 = por %p34, %p35
      %p37 = scmp.ne.s32.totalorder %s29, %s32
      %p38 = scmp.eq.s32.totalorder %s19, 0
      %p39 = por %p37, %p38
      %p40 = scmp.ne.s32.totalorder %s29, %s32
      %p41 = scmp.eq.s32.totalorder %s24, 1
      %p42 = por %p40, %p41
      %p43 = scmp.ne.s32.totalorder %s32, %s33
      %p44 = scmp.eq.s32.totalorder %s24, 0
      %p45 = por %p43, %p44
      %p46 = scmp.ne.s32.totalorder %s32, %s33
      %p47 = scmp.eq.s32.totalorder %s25, 1
      %p48 = por %p46, %p47
      %p50 = scmp.ne.s32.totalorder %s33, %s49
      %p51 = scmp.eq.s32.totalorder %s25, 0
      %p52 = por %p50, %p51
      %s53 = ssub.s32 %s19, %s26
      %p54 = scmp.eq.s32.totalorder %s53, 0
      %s56 = sadd.s32 %s55, 1
      %s57 = scalar_select %p54, %s55, %s56
      %p60 = pneg %p54
      %p61 = scmp.eq.s32.totalorder %s19, 1
      %p62 = por %p60, %p61
      %p63 = scmp.ne.s32.totalorder %s55, %s58
      %p64 = scmp.eq.s32.totalorder %s19, 0
      %p65 = por %p63, %p64
      %p66 = scmp.ne.s32.totalorder %s55, %s58
      %p67 = scmp.eq.s32.totalorder %s24, 1
      %p68 = por %p66, %p67
      %p69 = scmp.ne.s32.totalorder %s58, %s59
      %p70 = scmp.eq.s32.totalorder %s24, 0
      %p71 = por %p69, %p70
      %p72 = scmp.ne.s32.totalorder %s58, %s59
      %p73 = scmp.eq.s32.totalorder %s25, 1
      %p74 = por %p72, %p73
      %p76 = scmp.ne.s32.totalorder %s59, %s75
      %p77 = scmp.eq.s32.totalorder %s25, 0
      %p78 = por %p76, %p77
      %s79 = ssub.s32 %s19, %s26
      %p80 = scmp.eq.s32.totalorder %s79, 0
      %s82 = sadd.s32 %s81, 1
      %s83 = scalar_select %p80, %s81, %s82
      %p86 = pneg %p80
      %p87 = scmp.eq.s32.totalorder %s19, 1
      %p88 = por %p86, %p87
      %p89 = scmp.ne.s32.totalorder %s81, %s84
      %p90 = scmp.eq.s32.totalorder %s19, 0
      %p91 = por %p89, %p90
      %p92 = scmp.ne.s32.totalorder %s81, %s84
      %p93 = scmp.eq.s32.totalorder %s24, 1
      %p94 = por %p92, %p93
      %p95 = scmp.ne.s32.totalorder %s84, %s85
      %p96 = scmp.eq.s32.totalorder %s24, 0
      %p97 = por %p95, %p96
      %p98 = scmp.ne.s32.totalorder %s84, %s85
      %p99 = scmp.eq.s32.totalorder %s25, 1
      %p100 = por %p98, %p99
      %p102 = scmp.ne.s32.totalorder %s85, %s101
      %p103 = scmp.eq.s32.totalorder %s25, 0
      %p104 = por %p102, %p103
      %s105 = ssub.s32 %s19, %s26
      %p106 = scmp.eq.s32.totalorder %s105, 0
      %s108 = sadd.s32 %s107, 1
      %s109 = scalar_select %p106, %s107, %s108
      %p112 = pneg %p106
      %p113 = scmp.eq.s32.totalorder %s19, 1
      %p114 = por %p112, %p113
      %p115 = scmp.ne.s32.totalorder %s107, %s110
      %p116 = scmp.eq.s32.totalorder %s19, 0
      %p117 = por %p115, %p116
      %p118 = scmp.ne.s32.totalorder %s107, %s110
      %p119 = scmp.eq.s32.totalorder %s24, 1
      %p120 = por %p118, %p119
      %p121 = scmp.ne.s32.totalorder %s110, %s111
      %p122 = scmp.eq.s32.totalorder %s24, 0
      %p123 = por %p121, %p122
      %p124 = scmp.ne.s32.totalorder %s110, %s111
      %p125 = scmp.eq.s32.totalorder %s25, 1
      %p126 = por %p124, %p125
      %p128 = scmp.ne.s32.totalorder %s111, %s127
      %p129 = scmp.eq.s32.totalorder %s25, 0
      %p130 = por %p128, %p129
      %s132 = sadd.s32 %s131, 1
      %p135 = scmp.eq.s32.totalorder %s19, 1
      %p136 = scmp.ne.s32.totalorder %s131, %s133
      %p137 = scmp.eq.s32.totalorder %s19, 0
      %p138 = por %p136, %p137
      %p139 = scmp.ne.s32.totalorder %s131, %s133
      %p140 = scmp.eq.s32.totalorder %s24, 1
      %p141 = por %p139, %p140
      %p142 = scmp.ne.s32.totalorder %s133, %s134
      %p143 = scmp.eq.s32.totalorder %s24, 0
      %p144 = por %p142, %p143
      %p145 = scmp.ne.s32.totalorder %s133, %s134
      %p146 = scmp.eq.s32.totalorder %s25, 1
      %p147 = por %p145, %p146
      %p149 = scmp.ne.s32.totalorder %s134, %s148
      %p150 = scmp.eq.s32.totalorder %s25, 0
      %p151 = por %p149, %p150
      %s153 = sadd.s32 %s152, 1
      %p156 = scmp.eq.s32.totalorder %s19, 1
      %p157 = scmp.ne.s32.totalorder %s152, %s154
      %p158 = scmp.eq.s32.totalorder %s19, 0
      %p159 = por %p157, %p158
      %p160 = scmp.ne.s32.totalorder %s152, %s154
      %p161 = scmp.eq.s32.totalorder %s24, 1
      %p162 = por %p160, %p161
      %p163 = scmp.ne.s32.totalorder %s154, %s155
      %p164 = scmp.eq.s32.totalorder %s24, 0
      %p165 = por %p163, %p164
      %p166 = scmp.ne.s32.totalorder %s154, %s155
      %p167 = scmp.eq.s32.totalorder %s25, 1
      %p168 = por %p166, %p167
      %p170 = scmp.ne.s32.totalorder %s155, %s169
      %p171 = scmp.eq.s32.totalorder %s25, 0
      %p172 = por %p170, %p171
      %p173 = scmp.le.s32.totalorder 1, %s19
      %p174 = scmp.lt.s32.totalorder %s19, 3
      %p175 = pnand %p173, %p174
      %p176 = pneg %p175
      // Predicated region
      $region9: #{tpu_custom_call.1} parent=5 // pred_check
        _
      $region10: #{tpu_custom_call.1} parent=5 // pred_check_branch
        %178 = sbr.rel (%p175) target = $region12
      $region11: #{tpu_custom_call.1} parent=5 // pred_region
        %s179 = ssub.s32 %s19, 1
        // Predicated region
        $region13: #{tpu_custom_call.1} parent=11 // pred_check
          %p180 = pneg %p144
        $region14: #{tpu_custom_call.1} parent=11 // pred_check_branch
          %182 = sbr.rel (%p180) target = $region16
        $region15: #{tpu_custom_call.1} parent=11 // pred_region
          %s184 = ssub.s32 2048, 2048
          %185 = vsyncadd [#allocation11], %s184
          %s186 = sshll.u32 [#allocation10], 4
          %s187 = int_to_ptr.vmem [resolvable:$true] %s186
          %192 = dma.hbm_to_vmem [thread:$0]  %s4, 2048, %s187, [#allocation11], 128, 128, 8
        $region16: #{tpu_custom_call.1} parent=11 // pred_fallthru
          _
      $region12: #{tpu_custom_call.1} parent=5 // pred_fallthru
        _
      %p193 = scmp.lt.s32.totalorder %s19, 2
      // Predicated region
      $region17: #{tpu_custom_call.1} parent=5 // pred_check
        %p194 = pneg %p193
      $region18: #{tpu_custom_call.1} parent=5 // pred_check_branch
        %196 = sbr.rel (%p194) target = $region20
      $region19: #{tpu_custom_call.1} parent=5 // pred_region
        // Predicated region
        $region21: #{tpu_custom_call.1} parent=19 // pred_check
          %p197 = pneg %p39
        $region22: #{tpu_custom_call.1} parent=19 // pred_check_branch
          %199 = sbr.rel (%p197) target = $region24
        $region23: #{tpu_custom_call.1} parent=19 // pred_region
          %s200 = sand.u32 %s29, 1
          %s201 = scalar_lea.sflag [#allocation5], %s200
          %s202 = sand.u32 %s29, 1
          %s203 = scalar_lea.vmem [#allocation4], %s202
          %s205 = ssub.s32 16, 16
          %206 = vsyncadd %s201, %s205
          %s207 = smul.addr %s19, 16
          %s208 = scalar_lea.hbm %s0, %s207
          %s210 = sshll.u32 %s203, 4
          %s211 = int_to_ptr.vmem [resolvable:$true] %s210
          %213 = dma.hbm_to_vmem [thread:$0]  %s208, 16, %s211, %s201
        $region24: #{tpu_custom_call.1} parent=19 // pred_fallthru
          _
        // Predicated region
        $region25: #{tpu_custom_call.1} parent=19 // pred_check
          %p214 = pneg %p65
        $region26: #{tpu_custom_call.1} parent=19 // pred_check_branch
          %216 = sbr.rel (%p214) target = $region28
        $region27: #{tpu_custom_call.1} parent=19 // pred_region
          %p217 = scmp.lt.s32.totalorder %s19, 1
          %s218 = scalar_select %p217, %s19, 1
          %s219 = scalar_lea.vmem %s1, %s218
        $region28: #{tpu_custom_call.1} parent=19 // pred_fallthru
          _
        // Predicated region
        $region29: #{tpu_custom_call.1} parent=19 // pred_check
          %p220 = pneg %p91
        $region30: #{tpu_custom_call.1} parent=19 // pred_check_branch
          %222 = sbr.rel (%p220) target = $region32
        $region31: #{tpu_custom_call.1} parent=19 // pred_region
          %s223 = sand.u32 %s19, 1
          %s224 = scalar_lea.sflag [#allocation8], %s223
          %s225 = sand.u32 %s81, 1
          %s226 = smul.addr %s225, 16
          %s227 = scalar_lea.vmem [#allocation7], %s226
          %s229 = ssub.s32 256, 256
          %230 = vsyncadd %s224, %s229
          %s231 = smul.addr %s19, 2
          %s232 = smul.addr %s231, 128
          %s233 = scalar_lea.hbm %s2, %s232
          %s235 = sshll.u32 %s227, 4
          %s236 = int_to_ptr.vmem [resolvable:$true] %s235
          %238 = dma.hbm_to_vmem [thread:$0]  %s233, 256, %s236, %s224
        $region32: #{tpu_custom_call.1} parent=19 // pred_fallthru
          _
        // Predicated region
        $region33: #{tpu_custom_call.1} parent=19 // pred_check
          %p239 = pneg %p117
        $region34: #{tpu_custom_call.1} parent=19 // pred_check_branch
          %241 = sbr.rel (%p239) target = $region36
        $region35: #{tpu_custom_call.1} parent=19 // pred_region
          %s242 = sand.u32 %s19, 1
          %s243 = scalar_lea.sflag [#allocation8], %s242
          %s244 = sand.u32 %s107, 1
          %s245 = smul.addr %s244, 16
          %s246 = scalar_lea.vmem [#allocation9], %s245
          %s248 = ssub.s32 256, 256
          %249 = vsyncadd %s243, %s248
          %s250 = smul.addr %s19, 2
          %s251 = smul.addr %s250, 128
          %s252 = scalar_lea.hbm %s3, %s251
          %s254 = sshll.u32 %s246, 4
          %s255 = int_to_ptr.vmem [resolvable:$true] %s254
          %257 = dma.hbm_to_vmem [thread:$0]  %s252, 256, %s255, %s243
        $region36: #{tpu_custom_call.1} parent=19 // pred_fallthru
          _
      $region20: #{tpu_custom_call.1} parent=5 // pred_fallthru
        _
      %p258 = scmp.le.s32.totalorder 1, %s19
      %p259 = scmp.lt.s32.totalorder %s19, 3
      %p260 = pnand %p258, %p259
      %p261 = pneg %p260
      // Predicated region
      $region37: #{tpu_custom_call.1} parent=5 // pred_check
        _
      $region38: #{tpu_custom_call.1} parent=5 // pred_check_branch
        %263 = sbr.rel (%p260) target = $region40
      $region39: #{tpu_custom_call.1} parent=5 // pred_region
        %s264 = ssub.s32 %s19, 1
        %s265 = sand.u32 %s32, 1
        %s266 = scalar_lea.sflag [#allocation5], %s265
        %s267 = sand.u32 %s32, 1
        %s268 = scalar_lea.vmem [#allocation4], %s267
        // Predicated region
        $region41: #{tpu_custom_call.1} parent=39 // pred_check
          %p269 = pneg %p45
        $region42: #{tpu_custom_call.1} parent=39 // pred_check_branch
          %271 = sbr.rel (%p269) target = $region44
        $region43: #{tpu_custom_call.1} parent=39 // pred_region
          %272 = dma.done %s266, 16
        $region44: #{tpu_custom_call.1} parent=39 // pred_fallthru
          _
        %s273 = sand.u32 %s24, 1
        %s274 = scalar_lea.sflag [#allocation8], %s273
        %s275 = sand.u32 %s84, 1
        %s276 = smul.addr %s275, 16
        %s277 = scalar_lea.vmem [#allocation7], %s276
        // Predicated region
        $region45: #{tpu_custom_call.1} parent=39 // pred_check
          %p278 = pneg %p97
        $region46: #{tpu_custom_call.1} parent=39 // pred_check_branch
          %280 = sbr.rel (%p278) target = $region48
        $region47: #{tpu_custom_call.1} parent=39 // pred_region
          %281 = dma.done %s274, 256
        $region48: #{tpu_custom_call.1} parent=39 // pred_fallthru
          _
        %s282 = sand.u32 %s24, 1
        %s283 = scalar_lea.sflag [#allocation8], %s282
        %s284 = sand.u32 %s110, 1
        %s285 = smul.addr %s284, 16
        %s286 = scalar_lea.vmem [#allocation9], %s285
        // Predicated region
        $region49: #{tpu_custom_call.1} parent=39 // pred_check
          %p287 = pneg %p123
        $region50: #{tpu_custom_call.1} parent=39 // pred_check_branch
          %289 = sbr.rel (%p287) target = $region52
        $region51: #{tpu_custom_call.1} parent=39 // pred_region
          %290 = dma.done %s283, 256
        $region52: #{tpu_custom_call.1} parent=39 // pred_fallthru
          _
        // Predicated region
        $region53: #{tpu_custom_call.1} parent=39 // pred_check
          %p291 = pneg %p144
        $region54: #{tpu_custom_call.1} parent=39 // pred_check_branch
          %293 = sbr.rel (%p291) target = $region56
        $region55: #{tpu_custom_call.1} parent=39 // pred_region
          %294 = dma.done [#allocation11], 2048
        $region56: #{tpu_custom_call.1} parent=39 // pred_fallthru
          _
        %s295 = sand.u32 %s32, 1
        %s296 = scalar_lea.sflag [#allocation5], %s295
        %s297 = sand.u32 %s32, 1
        %s298 = scalar_lea.vmem [#allocation4], %s297
        %p299 = pneg %p45
        %p300 = pneg %p42
        %p301 = scmp.lt.s32.totalorder %s24, 1
        %s302 = scalar_select %p301, %s24, 1
        %s303 = scalar_lea.vmem %s1, %s302
        %p304 = pneg %p71
        %p305 = pneg %p68
        %s306 = sand.u32 %s24, 1
        %s307 = scalar_lea.sflag [#allocation8], %s306
        %s308 = sand.u32 %s84, 1
        %s309 = smul.addr %s308, 16
        %s310 = scalar_lea.vmem [#allocation7], %s309
        %p311 = pneg %p97
        %p312 = pneg %p94
        %s313 = sand.u32 %s24, 1
        %s314 = scalar_lea.sflag [#allocation8], %s313
        %s315 = sand.u32 %s110, 1
        %s316 = smul.addr %s315, 16
        %s317 = scalar_lea.vmem [#allocation9], %s316
        %p318 = pneg %p123
        %p319 = pneg %p120
        %p320 = pneg %p144
        %p321 = pneg %p141
        %p322 = pneg %p165
        %p323 = pneg %p162
        %p324 = scmp.lt.s32.totalorder %s24, 1
        %s325 = scalar_select %p324, %s24, 1
        %s326 = scalar_lea.vmem %s1, %s325
        %p327 = scmp.eq.s32.totalorder %s24, 0
        // Predicated region
        $region57: #{tpu_custom_call.1} parent=39 // pred_check
          %p328 = pneg %p327
        $region58: #{tpu_custom_call.1} parent=39 // pred_check_branch
          %330 = sbr.rel (%p328) target = $region60
        $region59: #{tpu_custom_call.1} parent=39 // pred_region
          %331 = vst [vmem:[#allocation3] sm:$0x1] 0.0
        $region60: #{tpu_custom_call.1} parent=39 // pred_fallthru
          _
        %v332 = vld [vmem:[%s277] sm:$0xff]
        %v333 = vld [vmem:[%s277 + $0x8] sm:$0xff]
        %334 = vst [vmem:[#allocation2] sm:$0xff] %v332
        %335 = vst [vmem:[#allocation2 + $0x8] sm:$0xff] %v333
        %v336 = vld [vmem:[%s286] sm:$0xff]
        %v337 = vld [vmem:[%s286 + $0x8] sm:$0xff]
        %338 = vst [vmem:[#allocation2 + $0x10] sm:$0xff] %v336
        %339 = vst [vmem:[#allocation2 + $0x18] sm:$0xff] %v337
        %v340 = vld [vmem:[#allocation2] sm:$0xff]
        %v341 = vld [vmem:[#allocation2 + $0x8] sm:$0xff]
        %v342 = vld [vmem:[#allocation2 + $0x10] sm:$0xff]
        %v343 = vld [vmem:[#allocation2 + $0x18] sm:$0xff]
        %v344 = vlaneseq
        %v345 = vshrl.u32 %v344, 7
        %v346 = vadd.s32 %v345, 8
        %v347 = vadd.s32 %v345, 16
        %v348 = vadd.s32 %v345, 24
        %v349 = vadd.s32 %v345, 32
        %v350 = vadd.s32 %v345, 40
        %v351 = vadd.s32 %v345, 48
        %v352 = vadd.s32 %v345, 56
        %v353 = vadd.s32 %v345, 64
        %v354 = vadd.s32 %v345, 72
        %v355 = vadd.s32 %v345, 80
        %v356 = vadd.s32 %v345, 88
        %v357 = vadd.s32 %v345, 96
        %v358 = vadd.s32 %v345, 104
        %v359 = vadd.s32 %v345, 112
        %v360 = vadd.s32 %v345, 120
        %v361 = vadd.s32 %v345, 128
        %v362 = vadd.s32 %v345, 136
        %v363 = vadd.s32 %v345, 144
        %v364 = vadd.s32 %v345, 152
        %v365 = vadd.s32 %v345, 160
        %v366 = vadd.s32 %v345, 168
        %v367 = vadd.s32 %v345, 176
        %v368 = vadd.s32 %v345, 184
        %v369 = vadd.s32 %v345, 192
        %v370 = vadd.s32 %v345, 200
        %v371 = vadd.s32 %v345, 208
        %v372 = vadd.s32 %v345, 216
        %v373 = vadd.s32 %v345, 224
        %v374 = vadd.s32 %v345, 232
        %v375 = vadd.s32 %v345, 240
        %v376 = vadd.s32 %v345, 248
        %v377 = vadd.s32 %v345, 256
        %v378 = vadd.s32 %v345, 264
        %v379 = vadd.s32 %v345, 272
        %v380 = vadd.s32 %v345, 280
        %v381 = vadd.s32 %v345, 288
        %v382 = vadd.s32 %v345, 296
        %v383 = vadd.s32 %v345, 304
        %v384 = vadd.s32 %v345, 312
        %v385 = vadd.s32 %v345, 320
        %v386 = vadd.s32 %v345, 328
        %v387 = vadd.s32 %v345, 336
        %v388 = vadd.s32 %v345, 344
        %v389 = vadd.s32 %v345, 352
        %v390 = vadd.s32 %v345, 360
        %v391 = vadd.s32 %v345, 368
        %v392 = vadd.s32 %v345, 376
        %v393 = vadd.s32 %v345, 384
        %v394 = vadd.s32 %v345, 392
        %v395 = vadd.s32 %v345, 400
        %v396 = vadd.s32 %v345, 408
        %v397 = vadd.s32 %v345, 416
        %v398 = vadd.s32 %v345, 424
        %v399 = vadd.s32 %v345, 432
        %v400 = vadd.s32 %v345, 440
        %v401 = vadd.s32 %v345, 448
        %v402 = vadd.s32 %v345, 456
        %v403 = vadd.s32 %v345, 464
        %v404 = vadd.s32 %v345, 472
        %v405 = vadd.s32 %v345, 480
        %v406 = vadd.s32 %v345, 488
        %v407 = vadd.s32 %v345, 496
        %v408 = vadd.s32 %v345, 504
        %v409 = vld [vmem:[%s268] sm:$0x1]
        %v410 = vlaneseq
        %v411 = vshrl.u32 %v410, 7
        %v412 = vsub.s32 0, %v411
        %v413 = vrot.slane %v409, %v412
        %vm414 = vcmp.eq.s32.totalorder %v345, %v413
        %vm415 = vcmp.eq.s32.totalorder %v346, %v413
        %vm416 = vcmp.eq.s32.totalorder %v347, %v413
        %vm417 = vcmp.eq.s32.totalorder %v348, %v413
        %vm418 = vcmp.eq.s32.totalorder %v349, %v413
        %vm419 = vcmp.eq.s32.totalorder %v350, %v413
        %vm420 = vcmp.eq.s32.totalorder %v351, %v413
        %vm421 = vcmp.eq.s32.totalorder %v352, %v413
        %vm422 = vcmp.eq.s32.totalorder %v353, %v413
        %vm423 = vcmp.eq.s32.totalorder %v354, %v413
        %vm424 = vcmp.eq.s32.totalorder %v355, %v413
        %vm425 = vcmp.eq.s32.totalorder %v356, %v413
        %vm426 = vcmp.eq.s32.totalorder %v357, %v413
        %vm427 = vcmp.eq.s32.totalorder %v358, %v413
        %vm428 = vcmp.eq.s32.totalorder %v359, %v413
        %vm429 = vcmp.eq.s32.totalorder %v360, %v413
        %vm430 = vcmp.eq.s32.totalorder %v361, %v413
        %vm431 = vcmp.eq.s32.totalorder %v362, %v413
        %vm432 = vcmp.eq.s32.totalorder %v363, %v413
        %vm433 = vcmp.eq.s32.totalorder %v364, %v413
        %vm434 = vcmp.eq.s32.totalorder %v365, %v413
        %vm435 = vcmp.eq.s32.totalorder %v366, %v413
        %vm436 = vcmp.eq.s32.totalorder %v367, %v413
        %vm437 = vcmp.eq.s32.totalorder %v368, %v413
        %vm438 = vcmp.eq.s32.totalorder %v369, %v413
        %vm439 = vcmp.eq.s32.totalorder %v370, %v413
        %vm440 = vcmp.eq.s32.totalorder %v371, %v413
        %vm441 = vcmp.eq.s32.totalorder %v372, %v413
        %vm442 = vcmp.eq.s32.totalorder %v373, %v413
        %vm443 = vcmp.eq.s32.totalorder %v374, %v413
        %vm444 = vcmp.eq.s32.totalorder %v375, %v413
        %vm445 = vcmp.eq.s32.totalorder %v376, %v413
        %vm446 = vcmp.eq.s32.totalorder %v377, %v413
        %vm447 = vcmp.eq.s32.totalorder %v378, %v413
        %vm448 = vcmp.eq.s32.totalorder %v379, %v413
        %vm449 = vcmp.eq.s32.totalorder %v380, %v413
        %vm450 = vcmp.eq.s32.totalorder %v381, %v413
        %vm451 = vcmp.eq.s32.totalorder %v382, %v413
        %vm452 = vcmp.eq.s32.totalorder %v383, %v413
        %vm453 = vcmp.eq.s32.totalorder %v384, %v413
        %vm454 = vcmp.eq.s32.totalorder %v385, %v413
        %vm455 = vcmp.eq.s32.totalorder %v386, %v413
        %vm456 = vcmp.eq.s32.totalorder %v387, %v413
        %vm457 = vcmp.eq.s32.totalorder %v388, %v413
        %vm458 = vcmp.eq.s32.totalorder %v389, %v413
        %vm459 = vcmp.eq.s32.totalorder %v390, %v413
        %vm460 = vcmp.eq.s32.totalorder %v391, %v413
        %vm461 = vcmp.eq.s32.totalorder %v392, %v413
        %vm462 = vcmp.eq.s32.totalorder %v393, %v413
        %vm463 = vcmp.eq.s32.totalorder %v394, %v413
        %vm464 = vcmp.eq.s32.totalorder %v395, %v413
        %vm465 = vcmp.eq.s32.totalorder %v396, %v413
        %vm466 = vcmp.eq.s32.totalorder %v397, %v413
        %vm467 = vcmp.eq.s32.totalorder %v398, %v413
        %vm468 = vcmp.eq.s32.totalorder %v399, %v413
        %vm469 = vcmp.eq.s32.totalorder %v400, %v413
        %vm470 = vcmp.eq.s32.totalorder %v401, %v413
        %vm471 = vcmp.eq.s32.totalorder %v402, %v413
        %vm472 = vcmp.eq.s32.totalorder %v403, %v413
        %vm473 = vcmp.eq.s32.totalorder %v404, %v413
        %vm474 = vcmp.eq.s32.totalorder %v405, %v413
        %vm475 = vcmp.eq.s32.totalorder %v406, %v413
        %vm476 = vcmp.eq.s32.totalorder %v407, %v413
        %vm477 = vcmp.eq.s32.totalorder %v408, %v413
        %v478 = vsel %vm414, 1, 0
        %v479 = vsel %vm415, 1, 0
        %v480 = vsel %vm416, 1, 0
        %v481 = vsel %vm417, 1, 0
        %v482 = vsel %vm418, 1, 0
        %v483 = vsel %vm419, 1, 0
        %v484 = vsel %vm420, 1, 0
        %v485 = vsel %vm421, 1, 0
        %v486 = vsel %vm422, 1, 0
        %v487 = vsel %vm423, 1, 0
        %v488 = vsel %vm424, 1, 0
        %v489 = vsel %vm425, 1, 0
        %v490 = vsel %vm426, 1, 0
        %v491 = vsel %vm427, 1, 0
        %v492 = vsel %vm428, 1, 0
        %v493 = vsel %vm429, 1, 0
        %v494 = vsel %vm430, 1, 0
        %v495 = vsel %vm431, 1, 0
        %v496 = vsel %vm432, 1, 0
        %v497 = vsel %vm433, 1, 0
        %v498 = vsel %vm434, 1, 0
        %v499 = vsel %vm435, 1, 0
        %v500 = vsel %vm436, 1, 0
        %v501 = vsel %vm437, 1, 0
        %v502 = vsel %vm438, 1, 0
        %v503 = vsel %vm439, 1, 0
        %v504 = vsel %vm440, 1, 0
        %v505 = vsel %vm441, 1, 0
        %v506 = vsel %vm442, 1, 0
        %v507 = vsel %vm443, 1, 0
        %v508 = vsel %vm444, 1, 0
        %v509 = vsel %vm445, 1, 0
        %v510 = vsel %vm446, 1, 0
        %v511 = vsel %vm447, 1, 0
        %v512 = vsel %vm448, 1, 0
        %v513 = vsel %vm449, 1, 0
        %v514 = vsel %vm450, 1, 0
        %v515 = vsel %vm451, 1, 0
        %v516 = vsel %vm452, 1, 0
        %v517 = vsel %vm453, 1, 0
        %v518 = vsel %vm454, 1, 0
        %v519 = vsel %vm455, 1, 0
        %v520 = vsel %vm456, 1, 0
        %v521 = vsel %vm457, 1, 0
        %v522 = vsel %vm458, 1, 0
        %v523 = vsel %vm459, 1, 0
        %v524 = vsel %vm460, 1, 0
        %v525 = vsel %vm461, 1, 0
        %v526 = vsel %vm462, 1, 0
        %v527 = vsel %vm463, 1, 0
        %v528 = vsel %vm464, 1, 0
        %v529 = vsel %vm465, 1, 0
        %v530 = vsel %vm466, 1, 0
        %v531 = vsel %vm467, 1, 0
        %v532 = vsel %vm468, 1, 0
        %v533 = vsel %vm469, 1, 0
        %v534 = vsel %vm470, 1, 0
        %v535 = vsel %vm471, 1, 0
        %v536 = vsel %vm472, 1, 0
        %v537 = vsel %vm473, 1, 0
        %v538 = vsel %vm474, 1, 0
        %v539 = vsel %vm475, 1, 0
        %v540 = vsel %vm476, 1, 0
        %v541 = vsel %vm477, 1, 0
        %v542 = vcvt.s32.f32 %v478
        %v543 = vcvt.s32.f32 %v479
        %v544 = vcvt.s32.f32 %v480
        %v545 = vcvt.s32.f32 %v481
        %v546 = vcvt.s32.f32 %v482
        %v547 = vcvt.s32.f32 %v483
        %v548 = vcvt.s32.f32 %v484
        %v549 = vcvt.s32.f32 %v485
        %v550 = vcvt.s32.f32 %v486
        %v551 = vcvt.s32.f32 %v487
        %v552 = vcvt.s32.f32 %v488
        %v553 = vcvt.s32.f32 %v489
        %v554 = vcvt.s32.f32 %v490
        %v555 = vcvt.s32.f32 %v491
        %v556 = vcvt.s32.f32 %v492
        %v557 = vcvt.s32.f32 %v493
        %v558 = vcvt.s32.f32 %v494
        %v559 = vcvt.s32.f32 %v495
        %v560 = vcvt.s32.f32 %v496
        %v561 = vcvt.s32.f32 %v497
        %v562 = vcvt.s32.f32 %v498
        %v563 = vcvt.s32.f32 %v499
        %v564 = vcvt.s32.f32 %v500
        %v565 = vcvt.s32.f32 %v501
        %v566 = vcvt.s32.f32 %v502
        %v567 = vcvt.s32.f32 %v503
        %v568 = vcvt.s32.f32 %v504
        %v569 = vcvt.s32.f32 %v505
        %v570 = vcvt.s32.f32 %v506
        %v571 = vcvt.s32.f32 %v507
        %v572 = vcvt.s32.f32 %v508
        %v573 = vcvt.s32.f32 %v509
        %v574 = vcvt.s32.f32 %v510
        %v575 = vcvt.s32.f32 %v511
        %v576 = vcvt.s32.f32 %v512
        %v577 = vcvt.s32.f32 %v513
        %v578 = vcvt.s32.f32 %v514
        %v579 = vcvt.s32.f32 %v515
        %v580 = vcvt.s32.f32 %v516
        %v581 = vcvt.s32.f32 %v517
        %v582 = vcvt.s32.f32 %v518
        %v583 = vcvt.s32.f32 %v519
        %v584 = vcvt.s32.f32 %v520
        %v585 = vcvt.s32.f32 %v521
        %v586 = vcvt.s32.f32 %v522
        %v587 = vcvt.s32.f32 %v523
        %v588 = vcvt.s32.f32 %v524
        %v589 = vcvt.s32.f32 %v525
        %v590 = vcvt.s32.f32 %v526
        %v591 = vcvt.s32.f32 %v527
        %v592 = vcvt.s32.f32 %v528
        %v593 = vcvt.s32.f32 %v529
        %v594 = vcvt.s32.f32 %v530
        %v595 = vcvt.s32.f32 %v531
        %v596 = vcvt.s32.f32 %v532
        %v597 = vcvt.s32.f32 %v533
        %v598 = vcvt.s32.f32 %v534
        %v599 = vcvt.s32.f32 %v535
        %v600 = vcvt.s32.f32 %v536
        %v601 = vcvt.s32.f32 %v537
        %v602 = vcvt.s32.f32 %v538
        %v603 = vcvt.s32.f32 %v539
        %v604 = vcvt.s32.f32 %v540
        %v605 = vcvt.s32.f32 %v541
        %v606 = vld [vmem:[%s326] sm:$0x1]
        %v607 = vlaneseq
        %v608 = vshrl.u32 %v607, 7
        %v609 = vsub.s32 0, %v608
        %v610 = vrot.slane %v606, %v609
        %vm611 = vcmp.eq.s32.totalorder %v345, %v610
        %vm612 = vcmp.eq.s32.totalorder %v346, %v610
        %vm613 = vcmp.eq.s32.totalorder %v347, %v610
        %vm614 = vcmp.eq.s32.totalorder %v348, %v610
        %vm615 = vcmp.eq.s32.totalorder %v349, %v610
        %vm616 = vcmp.eq.s32.totalorder %v350, %v610
        %vm617 = vcmp.eq.s32.totalorder %v351, %v610
        %vm618 = vcmp.eq.s32.totalorder %v352, %v610
        %vm619 = vcmp.eq.s32.totalorder %v353, %v610
        %vm620 = vcmp.eq.s32.totalorder %v354, %v610
        %vm621 = vcmp.eq.s32.totalorder %v355, %v610
        %vm622 = vcmp.eq.s32.totalorder %v356, %v610
        %vm623 = vcmp.eq.s32.totalorder %v357, %v610
        %vm624 = vcmp.eq.s32.totalorder %v358, %v610
        %vm625 = vcmp.eq.s32.totalorder %v359, %v610
        %vm626 = vcmp.eq.s32.totalorder %v360, %v610
        %vm627 = vcmp.eq.s32.totalorder %v361, %v610
        %vm628 = vcmp.eq.s32.totalorder %v362, %v610
        %vm629 = vcmp.eq.s32.totalorder %v363, %v610
        %vm630 = vcmp.eq.s32.totalorder %v364, %v610
        %vm631 = vcmp.eq.s32.totalorder %v365, %v610
        %vm632 = vcmp.eq.s32.totalorder %v366, %v610
        %vm633 = vcmp.eq.s32.totalorder %v367, %v610
        %vm634 = vcmp.eq.s32.totalorder %v368, %v610
        %vm635 = vcmp.eq.s32.totalorder %v369, %v610
        %vm636 = vcmp.eq.s32.totalorder %v370, %v610
        %vm637 = vcmp.eq.s32.totalorder %v371, %v610
        %vm638 = vcmp.eq.s32.totalorder %v372, %v610
        %vm639 = vcmp.eq.s32.totalorder %v373, %v610
        %vm640 = vcmp.eq.s32.totalorder %v374, %v610
        %vm641 = vcmp.eq.s32.totalorder %v375, %v610
        %vm642 = vcmp.eq.s32.totalorder %v376, %v610
        %vm643 = vcmp.eq.s32.totalorder %v377, %v610
        %vm644 = vcmp.eq.s32.totalorder %v378, %v610
        %vm645 = vcmp.eq.s32.totalorder %v379, %v610
        %vm646 = vcmp.eq.s32.totalorder %v380, %v610
        %vm647 = vcmp.eq.s32.totalorder %v381, %v610
        %vm648 = vcmp.eq.s32.totalorder %v382, %v610
        %vm649 = vcmp.eq.s32.totalorder %v383, %v610
        %vm650 = vcmp.eq.s32.totalorder %v384, %v610
        %vm651 = vcmp.eq.s32.totalorder %v385, %v610
        %vm652 = vcmp.eq.s32.totalorder %v386, %v610
        %vm653 = vcmp.eq.s32.totalorder %v387, %v610
        %vm654 = vcmp.eq.s32.totalorder %v388, %v610
        %vm655 = vcmp.eq.s32.totalorder %v389, %v610
        %vm656 = vcmp.eq.s32.totalorder %v390, %v610
        %vm657 = vcmp.eq.s32.totalorder %v391, %v610
        %vm658 = vcmp.eq.s32.totalorder %v392, %v610
        %vm659 = vcmp.eq.s32.totalorder %v393, %v610
        %vm660 = vcmp.eq.s32.totalorder %v394, %v610
        %vm661 = vcmp.eq.s32.totalorder %v395, %v610
        %vm662 = vcmp.eq.s32.totalorder %v396, %v610
        %vm663 = vcmp.eq.s32.totalorder %v397, %v610
        %vm664 = vcmp.eq.s32.totalorder %v398, %v610
        %vm665 = vcmp.eq.s32.totalorder %v399, %v610
        %vm666 = vcmp.eq.s32.totalorder %v400, %v610
        %vm667 = vcmp.eq.s32.totalorder %v401, %v610
        %vm668 = vcmp.eq.s32.totalorder %v402, %v610
        %vm669 = vcmp.eq.s32.totalorder %v403, %v610
        %vm670 = vcmp.eq.s32.totalorder %v404, %v610
        %vm671 = vcmp.eq.s32.totalorder %v405, %v610
        %vm672 = vcmp.eq.s32.totalorder %v406, %v610
        %vm673 = vcmp.eq.s32.totalorder %v407, %v610
        %vm674 = vcmp.eq.s32.totalorder %v408, %v610
        %v675 = vsel %vm611, 1, 0
        %v676 = vsel %vm612, 1, 0
        %v677 = vsel %vm613, 1, 0
        %v678 = vsel %vm614, 1, 0
        %v679 = vsel %vm615, 1, 0
        %v680 = vsel %vm616, 1, 0
        %v681 = vsel %vm617, 1, 0
        %v682 = vsel %vm618, 1, 0
        %v683 = vsel %vm619, 1, 0
        %v684 = vsel %vm620, 1, 0
        %v685 = vsel %vm621, 1, 0
        %v686 = vsel %vm622, 1, 0
        %v687 = vsel %vm623, 1, 0
        %v688 = vsel %vm624, 1, 0
        %v689 = vsel %vm625, 1, 0
        %v690 = vsel %vm626, 1, 0
        %v691 = vsel %vm627, 1, 0
        %v692 = vsel %vm628, 1, 0
        %v693 = vsel %vm629, 1, 0
        %v694 = vsel %vm630, 1, 0
        %v695 = vsel %vm631, 1, 0
        %v696 = vsel %vm632, 1, 0
        %v697 = vsel %vm633, 1, 0
        %v698 = vsel %vm634, 1, 0
        %v699 = vsel %vm635, 1, 0
        %v700 = vsel %vm636, 1, 0
        %v701 = vsel %vm637, 1, 0
        %v702 = vsel %vm638, 1, 0
        %v703 = vsel %vm639, 1, 0
        %v704 = vsel %vm640, 1, 0
        %v705 = vsel %vm641, 1, 0
        %v706 = vsel %vm642, 1, 0
        %v707 = vsel %vm643, 1, 0
        %v708 = vsel %vm644, 1, 0
        %v709 = vsel %vm645, 1, 0
        %v710 = vsel %vm646, 1, 0
        %v711 = vsel %vm647, 1, 0
        %v712 = vsel %vm648, 1, 0
        %v713 = vsel %vm649, 1, 0
        %v714 = vsel %vm650, 1, 0
        %v715 = vsel %vm651, 1, 0
        %v716 = vsel %vm652, 1, 0
        %v717 = vsel %vm653, 1, 0
        %v718 = vsel %vm654, 1, 0
        %v719 = vsel %vm655, 1, 0
        %v720 = vsel %vm656, 1, 0
        %v721 = vsel %vm657, 1, 0
        %v722 = vsel %vm658, 1, 0
        %v723 = vsel %vm659, 1, 0
        %v724 = vsel %vm660, 1, 0
        %v725 = vsel %vm661, 1, 0
        %v726 = vsel %vm662, 1, 0
        %v727 = vsel %vm663, 1, 0
        %v728 = vsel %vm664, 1, 0
        %v729 = vsel %vm665, 1, 0
        %v730 = vsel %vm666, 1, 0
        %v731 = vsel %vm667, 1, 0
        %v732 = vsel %vm668, 1, 0
        %v733 = vsel %vm669, 1, 0
        %v734 = vsel %vm670, 1, 0
        %v735 = vsel %vm671, 1, 0
        %v736 = vsel %vm672, 1, 0
        %v737 = vsel %vm673, 1, 0
        %v738 = vsel %vm674, 1, 0
        %v739 = vcvt.s32.f32 %v675
        %v740 = vcvt.s32.f32 %v676
        %v741 = vcvt.s32.f32 %v677
        %v742 = vcvt.s32.f32 %v678
        %v743 = vcvt.s32.f32 %v679
        %v744 = vcvt.s32.f32 %v680
        %v745 = vcvt.s32.f32 %v681
        %v746 = vcvt.s32.f32 %v682
        %v747 = vcvt.s32.f32 %v683
        %v748 = vcvt.s32.f32 %v684
        %v749 = vcvt.s32.f32 %v685
        %v750 = vcvt.s32.f32 %v686
        %v751 = vcvt.s32.f32 %v687
        %v752 = vcvt.s32.f32 %v688
        %v753 = vcvt.s32.f32 %v689
        %v754 = vcvt.s32.f32 %v690
        %v755 = vcvt.s32.f32 %v691
        %v756 = vcvt.s32.f32 %v692
        %v757 = vcvt.s32.f32 %v693
        %v758 = vcvt.s32.f32 %v694
        %v759 = vcvt.s32.f32 %v695
        %v760 = vcvt.s32.f32 %v696
        %v761 = vcvt.s32.f32 %v697
        %v762 = vcvt.s32.f32 %v698
        %v763 = vcvt.s32.f32 %v699
        %v764 = vcvt.s32.f32 %v700
        %v765 = vcvt.s32.f32 %v701
        %v766 = vcvt.s32.f32 %v702
        %v767 = vcvt.s32.f32 %v703
        %v768 = vcvt.s32.f32 %v704
        %v769 = vcvt.s32.f32 %v705
        %v770 = vcvt.s32.f32 %v706
        %v771 = vcvt.s32.f32 %v707
        %v772 = vcvt.s32.f32 %v708
        %v773 = vcvt.s32.f32 %v709
        %v774 = vcvt.s32.f32 %v710
        %v775 = vcvt.s32.f32 %v711
        %v776 = vcvt.s32.f32 %v712
        %v777 = vcvt.s32.f32 %v713
        %v778 = vcvt.s32.f32 %v714
        %v779 = vcvt.s32.f32 %v715
        %v780 = vcvt.s32.f32 %v716
        %v781 = vcvt.s32.f32 %v717
        %v782 = vcvt.s32.f32 %v718
        %v783 = vcvt.s32.f32 %v719
        %v784 = vcvt.s32.f32 %v720
        %v785 = vcvt.s32.f32 %v721
        %v786 = vcvt.s32.f32 %v722
        %v787 = vcvt.s32.f32 %v723
        %v788 = vcvt.s32.f32 %v724
        %v789 = vcvt.s32.f32 %v725
        %v790 = vcvt.s32.f32 %v726
        %v791 = vcvt.s32.f32 %v727
        %v792 = vcvt.s32.f32 %v728
        %v793 = vcvt.s32.f32 %v729
        %v794 = vcvt.s32.f32 %v730
        %v795 = vcvt.s32.f32 %v731
        %v796 = vcvt.s32.f32 %v732
        %v797 = vcvt.s32.f32 %v733
        %v798 = vcvt.s32.f32 %v734
        %v799 = vcvt.s32.f32 %v735
        %v800 = vcvt.s32.f32 %v736
        %v801 = vcvt.s32.f32 %v737
        %v802 = vcvt.s32.f32 %v738
        %v803 = vsub.f32 %v542, %v739
        %v804 = vsub.f32 %v543, %v740
        %v805 = vsub.f32 %v544, %v741
        %v806 = vsub.f32 %v545, %v742
        %v807 = vsub.f32 %v546, %v743
        %v808 = vsub.f32 %v547, %v744
        %v809 = vsub.f32 %v548, %v745
        %v810 = vsub.f32 %v549, %v746
        %v811 = vsub.f32 %v550, %v747
        %v812 = vsub.f32 %v551, %v748
        %v813 = vsub.f32 %v552, %v749
        %v814 = vsub.f32 %v553, %v750
        %v815 = vsub.f32 %v554, %v751
        %v816 = vsub.f32 %v555, %v752
        %v817 = vsub.f32 %v556, %v753
        %v818 = vsub.f32 %v557, %v754
        %v819 = vsub.f32 %v558, %v755
        %v820 = vsub.f32 %v559, %v756
        %v821 = vsub.f32 %v560, %v757
        %v822 = vsub.f32 %v561, %v758
        %v823 = vsub.f32 %v562, %v759
        %v824 = vsub.f32 %v563, %v760
        %v825 = vsub.f32 %v564, %v761
        %v826 = vsub.f32 %v565, %v762
        %v827 = vsub.f32 %v566, %v763
        %v828 = vsub.f32 %v567, %v764
        %v829 = vsub.f32 %v568, %v765
        %v830 = vsub.f32 %v569, %v766
        %v831 = vsub.f32 %v570, %v767
        %v832 = vsub.f32 %v571, %v768
        %v833 = vsub.f32 %v572, %v769
        %v834 = vsub.f32 %v573, %v770
        %v835 = vsub.f32 %v574, %v771
        %v836 = vsub.f32 %v575, %v772
        %v837 = vsub.f32 %v576, %v773
        %v838 = vsub.f32 %v577, %v774
        %v839 = vsub.f32 %v578, %v775
        %v840 = vsub.f32 %v579, %v776
        %v841 = vsub.f32 %v580, %v777
        %v842 = vsub.f32 %v581, %v778
        %v843 = vsub.f32 %v582, %v779
        %v844 = vsub.f32 %v583, %v780
        %v845 = vsub.f32 %v584, %v781
        %v846 = vsub.f32 %v585, %v782
        %v847 = vsub.f32 %v586, %v783
        %v848 = vsub.f32 %v587, %v784
        %v849 = vsub.f32 %v588, %v785
        %v850 = vsub.f32 %v589, %v786
        %v851 = vsub.f32 %v590, %v787
        %v852 = vsub.f32 %v591, %v788
        %v853 = vsub.f32 %v592, %v789
        %v854 = vsub.f32 %v593, %v790
        %v855 = vsub.f32 %v594, %v791
        %v856 = vsub.f32 %v595, %v792
        %v857 = vsub.f32 %v596, %v793
        %v858 = vsub.f32 %v597, %v794
        %v859 = vsub.f32 %v598, %v795
        %v860 = vsub.f32 %v599, %v796
        %v861 = vsub.f32 %v600, %v797
        %v862 = vsub.f32 %v601, %v798
        %v863 = vsub.f32 %v602, %v799
        %v864 = vsub.f32 %v603, %v800
        %v865 = vsub.f32 %v604, %v801
        %v866 = vsub.f32 %v605, %v802
        %867 = vmatprep.subr.mxu0 0.0
        %868 = vmatpush1.msra.mxu0 %v803
        %869 = vmatprep.subr.mxu0 0.0
        %870 = vmatpush1.msra.mxu0 %v804
        %871 = vmatprep.subr.mxu0 0.0
        %872 = vmatpush1.msra.mxu0 %v805
        %873 = vmatprep.subr.mxu0 0.0
        %874 = vmatpush1.msra.mxu0 %v806
        %875 = vmatprep.subr.mxu0 0.0
        %876 = vmatpush1.msra.mxu0 %v807
        %877 = vmatprep.subr.mxu0 0.0
        %878 = vmatpush1.msra.mxu0 %v808
        %879 = vmatprep.subr.mxu0 0.0
        %880 = vmatpush1.msra.mxu0 %v809
        %881 = vmatprep.subr.mxu0 0.0
        %882 = vmatpush1.msra.mxu0 %v810
        %883 = vmatprep.subr.mxu0 0.0
        %884 = vmatpush1.msra.mxu0 %v811
        %885 = vmatprep.subr.mxu0 0.0
        %886 = vmatpush1.msra.mxu0 %v812
        %887 = vmatprep.subr.mxu0 0.0
        %888 = vmatpush1.msra.mxu0 %v813
        %889 = vmatprep.subr.mxu0 0.0
        %890 = vmatpush1.msra.mxu0 %v814
        %891 = vmatprep.subr.mxu0 0.0
        %892 = vmatpush1.msra.mxu0 %v815
        %893 = vmatprep.subr.mxu0 0.0
        %894 = vmatpush1.msra.mxu0 %v816
        %895 = vmatprep.subr.mxu0 0.0
        %896 = vmatpush1.msra.mxu0 %v817
        %897 = vmatprep.subr.mxu0 0.0
        %898 = vmatpush1.msra.mxu0 %v818
        %899 = vmatprep.subr.mxu0 0.0
        %900 = vmatpush1.msra.mxu0 %v819
        %901 = vmatprep.subr.mxu0 0.0
        %902 = vmatpush1.msra.mxu0 %v820
        %903 = vmatprep.subr.mxu0 0.0
        %904 = vmatpush1.msra.mxu0 %v821
        %905 = vmatprep.subr.mxu0 0.0
        %906 = vmatpush1.msra.mxu0 %v822
        %907 = vmatprep.subr.mxu0 0.0
        %908 = vmatpush1.msra.mxu0 %v823
        %909 = vmatprep.subr.mxu0 0.0
        %910 = vmatpush1.msra.mxu0 %v824
        %911 = vmatprep.subr.mxu0 0.0
        %912 = vmatpush1.msra.mxu0 %v825
        %913 = vmatprep.subr.mxu0 0.0
        %914 = vmatpush1.msra.mxu0 %v826
        %915 = vmatprep.subr.mxu0 0.0
        %916 = vmatpush1.msra.mxu0 %v827
        %917 = vmatprep.subr.mxu0 0.0
        %918 = vmatpush1.msra.mxu0 %v828
        %919 = vmatprep.subr.mxu0 0.0
        %920 = vmatpush1.msra.mxu0 %v829
        %921 = vmatprep.subr.mxu0 0.0
        %922 = vmatpush1.msra.mxu0 %v830
        %923 = vmatprep.subr.mxu0 0.0
        %924 = vmatpush1.msra.mxu0 %v831
        %925 = vmatprep.subr.mxu0 0.0
        %926 = vmatpush1.msra.mxu0 %v832
        %927 = vmatprep.subr.mxu0 0.0
        %928 = vmatpush1.msra.mxu0 %v833
        %929 = vmatprep.subr.mxu0 0.0
        %930 = vmatpush1.msra.mxu0 %v834
        %931 = vmatprep.mubr.f32.mxu0 %v341
        %932 = vmatmul.mubr.f32.gmra.mrb[0].mxu0 %v340
        %v933 = vpop.f32.mrb[0].mxu0
        %v934 = vadd.f32 0.0, %v933
        %v935 = vpop.f32.mrb[0].mxu0
        %936 = vdwg.mxu0
        %937 = vmatprep.subr.mxu0 0.0
        %938 = vmatpush1.msra.mxu0 %v835
        %939 = vmatprep.subr.mxu0 0.0
        %940 = vmatpush1.msra.mxu0 %v836
        %941 = vmatprep.subr.mxu0 0.0
        %942 = vmatpush1.msra.mxu0 %v837
        %943 = vmatprep.subr.mxu0 0.0
        %944 = vmatpush1.msra.mxu0 %v838
        %945 = vmatprep.subr.mxu0 0.0
        %946 = vmatpush1.msra.mxu0 %v839
        %947 = vmatprep.subr.mxu0 0.0
        %948 = vmatpush1.msra.mxu0 %v840
        %949 = vmatprep.subr.mxu0 0.0
        %950 = vmatpush1.msra.mxu0 %v841
        %951 = vmatprep.subr.mxu0 0.0
        %952 = vmatpush1.msra.mxu0 %v842
        %953 = vmatprep.subr.mxu0 0.0
        %954 = vmatpush1.msra.mxu0 %v843
        %955 = vmatprep.subr.mxu0 0.0
        %956 = vmatpush1.msra.mxu0 %v844
        %957 = vmatprep.subr.mxu0 0.0
        %958 = vmatpush1.msra.mxu0 %v845
        %959 = vmatprep.subr.mxu0 0.0
        %960 = vmatpush1.msra.mxu0 %v846
        %961 = vmatprep.subr.mxu0 0.0
        %962 = vmatpush1.msra.mxu0 %v847
        %963 = vmatprep.subr.mxu0 0.0
        %964 = vmatpush1.msra.mxu0 %v848
        %965 = vmatprep.subr.mxu0 0.0
        %966 = vmatpush1.msra.mxu0 %v849
        %967 = vmatprep.subr.mxu0 0.0
        %968 = vmatpush1.msra.mxu0 %v850
        %969 = vmatprep.subr.mxu0 0.0
        %970 = vmatpush1.msra.mxu0 %v851
        %971 = vmatprep.subr.mxu0 0.0
        %972 = vmatpush1.msra.mxu0 %v852
        %973 = vmatprep.subr.mxu0 0.0
        %974 = vmatpush1.msra.mxu0 %v853
        %975 = vmatprep.subr.mxu0 0.0
        %976 = vmatpush1.msra.mxu0 %v854
        %977 = vmatprep.subr.mxu0 0.0
        %978 = vmatpush1.msra.mxu0 %v855
        %979 = vmatprep.subr.mxu0 0.0
        %980 = vmatpush1.msra.mxu0 %v856
        %981 = vmatprep.subr.mxu0 0.0
        %982 = vmatpush1.msra.mxu0 %v857
        %983 = vmatprep.subr.mxu0 0.0
        %984 = vmatpush1.msra.mxu0 %v858
        %985 = vmatprep.subr.mxu0 0.0
        %986 = vmatpush1.msra.mxu0 %v859
        %987 = vmatprep.subr.mxu0 0.0
        %988 = vmatpush1.msra.mxu0 %v860
        %989 = vmatprep.subr.mxu0 0.0
        %990 = vmatpush1.msra.mxu0 %v861
        %991 = vmatprep.subr.mxu0 0.0
        %992 = vmatpush1.msra.mxu0 %v862
        %993 = vmatprep.subr.mxu0 0.0
        %994 = vmatpush1.msra.mxu0 %v863
        %995 = vmatprep.subr.mxu0 0.0
        %996 = vmatpush1.msra.mxu0 %v864
        %997 = vmatprep.subr.mxu0 0.0
        %998 = vmatpush1.msra.mxu0 %v865
        %999 = vmatprep.subr.mxu0 0.0
        %1000 = vmatpush1.msra.mxu0 %v866
        %1001 = vmatprep.mubr.f32.mxu0 %v343
        %1002 = vmatmul.mubr.f32.gmra.mrb[0].mxu0 %v342
        %v1003 = vpop.f32.mrb[0].mxu0
        %v1004 = vadd.f32 %v934, %v1003
        %v1005 = vpop.f32.mrb[0].mxu0
        %1006 = vdwg.mxu0
        %v1007 = vmul.f32 %v1004, %v1004
        %v1008 = vrot.slane %v1007, 4
        %v1009 = vadd.f32 %v1007, %v1008
        %v1010 = vrot.slane %v1009, 2
        %v1011 = vadd.f32 %v1009, %v1010
        %v1012 = vrot.slane %v1011, 1
        %v1013 = vadd.f32 %v1011, %v1012
        %v1014 = vadd.f32 %v1013, 1e-07
        %v1015 = vrsqrt.pop %v1014
        %v1016 = vmul.f32 %v1014, %v1015
        %vm1017 = vcmp.eq.f32.partialorder %v1014, inf
        %v1018 = vsel %vm1017, %v1014, %v1016
        %vm1019 = vcmp.eq.f32.partialorder %v1014, 0.0
        %v1020 = vand.u32 %v1014, 2147483648
        %v1021 = vsel %vm1019, %v1020, %v1018
        %v1022 = vld [vmem:[#allocation10] sm:$0xff]
        %v1023 = vld [vmem:[#allocation10 + $0x8] sm:$0xff]
        %v1024 = vld [vmem:[#allocation10 + $0x10] sm:$0xff]
        %v1025 = vld [vmem:[#allocation10 + $0x18] sm:$0xff]
        %v1026 = vld [vmem:[#allocation10 + $0x20] sm:$0xff]
        %v1027 = vld [vmem:[#allocation10 + $0x28] sm:$0xff]
        %v1028 = vld [vmem:[#allocation10 + $0x30] sm:$0xff]
        %v1029 = vld [vmem:[#allocation10 + $0x38] sm:$0xff]
        %v1030 = vld [vmem:[#allocation10 + $0x40] sm:$0xff]
        %v1031 = vld [vmem:[#allocation10 + $0x48] sm:$0xff]
        %v1032 = vld [vmem:[#allocation10 + $0x50] sm:$0xff]
        %v1033 = vld [vmem:[#allocation10 + $0x58] sm:$0xff]
        %v1034 = vld [vmem:[#allocation10 + $0x60] sm:$0xff]
        %v1035 = vld [vmem:[#allocation10 + $0x68] sm:$0xff]
        %v1036 = vld [vmem:[#allocation10 + $0x70] sm:$0xff]
        %v1037 = vld [vmem:[#allocation10 + $0x78] sm:$0xff]
        %1038 = vmatprep.subr.mxu0 0.0
        %1039 = vmatpush1.msra.mxu0 %v1022
        %1040 = vmatprep.subr.mxu0 0.0
        %1041 = vmatpush1.msra.mxu0 %v1023
        %1042 = vmatprep.subr.mxu0 0.0
        %1043 = vmatpush1.msra.mxu0 %v1024
        %1044 = vmatprep.subr.mxu0 0.0
        %1045 = vmatpush1.msra.mxu0 %v1025
        %1046 = vmatprep.subr.mxu0 0.0
        %1047 = vmatpush1.msra.mxu0 %v1026
        %1048 = vmatprep.subr.mxu0 0.0
        %1049 = vmatpush1.msra.mxu0 %v1027
        %1050 = vmatprep.subr.mxu0 0.0
        %1051 = vmatpush1.msra.mxu0 %v1028
        %1052 = vmatprep.subr.mxu0 0.0
        %1053 = vmatpush1.msra.mxu0 %v1029
        %1054 = vmatprep.subr.mxu0 0.0
        %1055 = vmatpush1.msra.mxu0 %v1030
        %1056 = vmatprep.subr.mxu0 0.0
        %1057 = vmatpush1.msra.mxu0 %v1031
        %1058 = vmatprep.subr.mxu0 0.0
        %1059 = vmatpush1.msra.mxu0 %v1032
        %1060 = vmatprep.subr.mxu0 0.0
        %1061 = vmatpush1.msra.mxu0 %v1033
        %1062 = vmatprep.subr.mxu0 0.0
        %1063 = vmatpush1.msra.mxu0 %v1034
        %1064 = vmatprep.subr.mxu0 0.0
        %1065 = vmatpush1.msra.mxu0 %v1035
        %1066 = vmatprep.subr.mxu0 0.0
        %1067 = vmatpush1.msra.mxu0 %v1036
        %1068 = vmatprep.subr.mxu0 0.0
        %1069 = vmatpush1.msra.mxu0 %v1037
        %1070 = vmatprep.subr.mxu0 0.0
        %1071 = vmatpush1.msra.mxu0 0.0
        %1072 = vmatprep.subr.mxu0 0.0
        %1073 = vmatpush1.msra.mxu0 0.0
        %1074 = vmatprep.subr.mxu0 0.0
        %1075 = vmatpush1.msra.mxu0 0.0
        %1076 = vmatprep.subr.mxu0 0.0
        %1077 = vmatpush1.msra.mxu0 0.0
        %1078 = vmatprep.subr.mxu0 0.0
        %1079 = vmatpush1.msra.mxu0 0.0
        %1080 = vmatprep.subr.mxu0 0.0
        %1081 = vmatpush1.msra.mxu0 0.0
        %1082 = vmatprep.subr.mxu0 0.0
        %1083 = vmatpush1.msra.mxu0 0.0
        %1084 = vmatprep.subr.mxu0 0.0
        %1085 = vmatpush1.msra.mxu0 0.0
        %1086 = vmatprep.subr.mxu0 0.0
        %1087 = vmatpush1.msra.mxu0 0.0
        %1088 = vmatprep.subr.mxu0 0.0
        %1089 = vmatpush1.msra.mxu0 0.0
        %1090 = vmatprep.subr.mxu0 0.0
        %1091 = vmatpush1.msra.mxu0 0.0
        %1092 = vmatprep.subr.mxu0 0.0
        %1093 = vmatpush1.msra.mxu0 0.0
        %1094 = vmatprep.subr.mxu0 0.0
        %1095 = vmatpush1.msra.mxu0 0.0
        %1096 = vmatprep.subr.mxu0 0.0
        %1097 = vmatpush1.msra.mxu0 0.0
        %1098 = vmatprep.subr.mxu0 0.0
        %1099 = vmatpush1.msra.mxu0 0.0
        %1100 = vmatprep.subr.mxu0 0.0
        %1101 = vmatpush1.msra.mxu0 0.0
        %1102 = vmatprep.mubr.f32.mxu0 0.0
        %1103 = vmatmul.mubr.f32.gmra.mrb[0].mxu0 %v1021
        %v1104 = vpop.f32.mrb[0].mxu0
        %v1105 = vadd.f32 0.0, %v1104
        %v1106 = vpop.f32.mrb[0].mxu0
        %1107 = vdwg.mxu0
        %v1108 = vlaneseq
        %v1109 = vand.u32 %v1108, 127
        %vm1110 = vcmp.lt.s32.totalorder %v1109, 8
        %v1111 = vsel %vm1110, 1, 0
        %v1112 = vcvt.s32.f32 %v1111
        %v1113 = vld [vmem:[#allocation3] sm:$0x1]
        %v1114 = vadd.f32 %v1105, 0.5
        %v1115 = vmax.f32 %v1114, 0.0
        %v1116 = vmul.f32 %v1115, %v1112
        %v1117 = vadd.f32 %v1113, %v1116
        %1118 = vst [vmem:[#allocation3] sm:$0x1] %v1117
        %v1119 = vld [vmem:[#allocation3] sm:$0x1]
        %vm1120 = vcmask 1040384
        %v1121 = vsel %vm1120, %v1119, 0.0
        %1122 = vadd.xlane.f32.xlu0 %v1121
        %v1123 = vpop.xlane.xlu0 %1122
        %v1124 = vmul.f32 %v1123, 0.0625
        %vm1125 = vcmask 0
        %1126 = vst.msk [vmem:[#allocation12] sm:$0x1] %vm1125, %v1124
        // Predicated region
        $region61: #{tpu_custom_call.1} parent=39 // pred_check
          %p1127 = pneg %p162
        $region62: #{tpu_custom_call.1} parent=39 // pred_check_branch
          %1129 = sbr.rel (%p1127) target = $region64
        $region63: #{tpu_custom_call.1} parent=39 // pred_region
          %s1131 = ssub.s32 16, 16
          %1132 = vsyncadd [#allocation6], %s1131
          %s1134 = sshll.u32 [#allocation12], 4
          %s1135 = int_to_ptr.vmem [resolvable:$true] %s1134
          %1137 = dma.vmem_to_hbm [thread:$0]  %s1135, 16, %s5, [#allocation6]
        $region64: #{tpu_custom_call.1} parent=39 // pred_fallthru
          _
        // Predicated region
        $region65: #{tpu_custom_call.1} parent=39 // pred_check
          %p1138 = pneg %p162
        $region66: #{tpu_custom_call.1} parent=39 // pred_check_branch
          %1140 = sbr.rel (%p1138) target = $region68
        $region67: #{tpu_custom_call.1} parent=39 // pred_region
          %1141 = dma.done [#allocation6], 16
        $region68: #{tpu_custom_call.1} parent=39 // pred_fallthru
          _
      $region40: #{tpu_custom_call.1} parent=5 // pred_fallthru
        _
      %p1142 = scmp.le.s32.totalorder 2, %s19
      // Predicated region
      $region69: #{tpu_custom_call.1} parent=5 // pred_check
        %p1143 = pneg %p1142
      $region70: #{tpu_custom_call.1} parent=5 // pred_check_branch
        %1145 = sbr.rel (%p1143) target = $region72
      $region71: #{tpu_custom_call.1} parent=5 // pred_region
        %s1146 = ssub.s32 %s19, 2
      $region72: #{tpu_custom_call.1} parent=5 // pred_fallthru
        _
    $region6: #{tpu_custom_call.1} parent=1 // loop_footer
      %s23 = sadd.s32 1, %s19
    $region7: #{tpu_custom_call.1} parent=1 // loop_footer_branch
      %18 = sbr.rel target = $region3
    $region8: #{tpu_custom_call.1} parent=1 // loop_exit
      _
    %1147 = vsyncpa [#allocation5], 1
    %s1148 = scalar_lea.sflag [#allocation5], 1
    %1149 = vsyncpa %s1148, 1
    %1150 = vsyncpa [#allocation8], 1
    %s1151 = scalar_lea.sflag [#allocation8], 1
    %1152 = vsyncpa %s1151, 1
    %1153 = vsyncpa [#allocation11], 1
    %1154 = vsyncpa [#allocation6], 1
    %s1155 = scalar_lea.sflag [#allocation6], 1
    %1156 = vsyncpa %s1155, 1

</llo_original>
